<compile_context>
chip_gen: v5e
topology: v5e:2x2
jax: 0.10.0
libtpu: 0.0.40
codegen_flags: <defaults>
</compile_context>

<pallas_src>
import jax
import jax.numpy as jnp
from jax.experimental import pallas as pl
from jax.experimental.pallas import tpu as pltpu

# ---- small, deterministic problem sizes --------------------------------------
B, CIN, H, W = 2, 4, 16, 16     # batch, input channels, spatial
HIDDEN = 32                     # hidden channels of the 3x3 conv
NCLS = 4                        # number of heatmap classes ('hm' head)
KH = KW = 3                     # 3x3 conv
ROWS = B * H * W                # 512  -> lane axis of every slab in the kernel
KCOL = KH * KW * CIN            # 36   -> im2col contraction size
KPAD = 48                       # 36 patch rows + 1 ones row (b1 fold) + zero pad to bf16 sublane tile
HPAD = 40                       # 32 hidden rows + 1 constant-one row (b2 fold) + zero pad to f32 sublane tile


# ---- fused model + loss kernel (single invocation, whole batch) ---------------
def _model_loss_kernel(xt_ref, w1a_ref, w2a_ref, tgt_ref, hm_ref, loss_ref):
    # xt_ref : (KPAD, ROWS)  bf16  im2col patches (kh,kw,cin ordering) + ones row + zero pad, lane-dense
    # w1a_ref: (HPAD, KPAD)  bf16  3x3 conv weight (im2col, transposed) with b1 column and constant-one row
    # w2a_ref: (NCLS, HPAD)  bf16  1x1 'hm' head weight (transposed) with b2 column
    # tgt_ref: (NCLS, ROWS)  f32   target heatmap, same transposed layout
    # hm_ref : (NCLS, ROWS)  f32   lane-dense heatmap output
    # loss_ref: (1, 1)       f32   scalar MSE loss (SMEM)

    # cast bf16 storage -> f32 compute (avoids bf16xbf16 dot; f32 matmul everywhere)
    x = xt_ref[...].astype(jnp.float32)                               # (KPAD, ROWS)
    w1 = w1a_ref[...].astype(jnp.float32)                             # (HPAD, KPAD)
    w2 = w2a_ref[...].astype(jnp.float32)                             # (NCLS, HPAD)

    # 3x3 "same" conv as one im2col matmul; bias b1 comes from the ones-row x bias-column product.
    # Row HIDDEN of the result is exactly 1.0 (constant-one row), rows > HIDDEN are 0.
    hfeat = jnp.maximum(jnp.dot(w1, x, preferred_element_type=jnp.float32), 0.0)   # (HPAD, ROWS)

    # 1x1 conv 'hm' head: bias b2 comes from the constant-one hidden row x bias-column product.
    logits = jnp.dot(w2, hfeat, preferred_element_type=jnp.float32)                # (NCLS, ROWS)
    hm = jax.nn.sigmoid(logits)
    hm_ref[...] = hm                                                  # lane-dense (512-lane) stores

    # MSE loss over the whole batch, written once as a scalar (SMEM scalar store)
    diff = hm - tgt_ref[...]
    loss_ref[0, 0] = jnp.sum(diff * diff) * (1.0 / (NCLS * ROWS))


# ---- JAX wrapper (layout plumbing: NCHW <-> transposed im2col slabs) ----------
@jax.jit
def _forward_impl(x_nchw, w1, b1, w2, b2, hm_target_nchw):
    # Build the im2col slab directly in (KCOL, ROWS) order, in bf16, with a single concat:
    #   NCHW -> (CIN, B, Hp, Wp) pad -> 9 shifted slices -> concat on axis 0 (+ ones row + zero pad)
    xb = x_nchw.astype(jnp.bfloat16)                                  # (B, CIN, H, W)
    xc = jnp.transpose(xb, (1, 0, 2, 3))                              # (CIN, B, H, W)
    xp = jnp.pad(xc, ((0, 0), (0, 0), (1, 1), (1, 1)))                # (CIN, B, H+2, W+2) bf16
    cols = [xp[:, :, kh:kh + H, kw:kw + W].reshape(CIN, ROWS)
            for kh in range(KH) for kw in range(KW)]                  # (kh, kw, cin) row ordering
    ones_row = jnp.ones((1, ROWS), jnp.bfloat16)                      # drives the b1 fold
    zero_pad = jnp.zeros((KPAD - KCOL - 1, ROWS), jnp.bfloat16)
    xt_aug = jnp.concatenate(cols + [ones_row, zero_pad], axis=0)     # (KPAD, ROWS) bf16, lane-dense

    # First-layer weight slab: (HPAD, KPAD) with b1 folded into column KCOL and a constant-one row.
    w1a = jnp.zeros((HPAD, KPAD), jnp.float32)
    w1a = w1a.at[:HIDDEN, :KCOL].set(w1.reshape(KCOL, HIDDEN).T)
    w1a = w1a.at[:HIDDEN, KCOL].set(b1.reshape(HIDDEN))
    w1a = w1a.at[HIDDEN, KCOL].set(1.0)                               # hidden row that stays 1 after ReLU
    w1a = w1a.astype(jnp.bfloat16)

    # Head weight slab: (NCLS, HPAD) with b2 folded into column HIDDEN.
    w2a = jnp.zeros((NCLS, HPAD), jnp.float32)
    w2a = w2a.at[:, :HIDDEN].set(w2.T)
    w2a = w2a.at[:, HIDDEN].set(b2.reshape(NCLS))
    w2a = w2a.astype(jnp.bfloat16)

    tgt_t = jnp.transpose(hm_target_nchw, (1, 0, 2, 3)) \
               .reshape(NCLS, ROWS).astype(jnp.float32)               # (NCLS, ROWS)

    hm_t, loss = pl.pallas_call(
        _model_loss_kernel,
        out_shape=(
            jax.ShapeDtypeStruct((NCLS, ROWS), jnp.float32),          # outputs[-1]['hm'] (transposed slab)
            jax.ShapeDtypeStruct((1, 1), jnp.float32),                # scalar loss
        ),
        in_specs=[pl.BlockSpec(memory_space=pltpu.MemorySpace.VMEM)] * 4,
        out_specs=(pl.BlockSpec(memory_space=pltpu.MemorySpace.VMEM),
                   pl.BlockSpec(memory_space=pltpu.MemorySpace.SMEM)),
    )(xt_aug, w1a, w2a, tgt_t)

    # (NCLS, B*H*W) -> (B, NCLS, H, W)  (back to the PyTorch NCHW convention)
    hm = jnp.transpose(hm_t.reshape(NCLS, B, H, W), (1, 0, 2, 3))
    return hm, loss[0, 0]


class ModleWithLoss:
    """Mirrors the PyTorch wrapper: model forward + loss, returns (outputs[-1], loss, loss_stats)."""

    def __init__(self, params):
        self.params = params   # (w1, b1, w2, b2)

    def forward(self, batch):
        x = batch[0]['input']
        hm, loss = _forward_impl(x, *self.params, batch[0]['hm'])
        outputs = [{'hm': hm}]                                        # model returns a list of head dicts
        loss_stats = {'loss': loss, 'hm_loss': loss}
        return outputs[-1], loss, loss_stats


# ---- pure-JAX reference (for a sanity check) ----------------------------------
def _reference(x_nchw, w1, b1, w2, b2, tgt_nchw):
    x = jnp.transpose(x_nchw, (0, 2, 3, 1)).astype(jnp.float32)
    y = jax.lax.conv_general_dilated(
        x, w1, window_strides=(1, 1), padding='SAME',
        dimension_numbers=('NHWC', 'HWIO', 'NHWC'))
    h = jnp.maximum(y + b1[0], 0.0)
    logits = jnp.einsum('bhwf,fk->bhwk', h, w2) + b2[0]
    hm = jax.nn.sigmoid(logits)
    tgt = jnp.transpose(tgt_nchw, (0, 2, 3, 1)).astype(jnp.float32)
    loss = jnp.mean((hm - tgt) ** 2)
    return jnp.transpose(hm, (0, 3, 1, 2)), loss


if __name__ == "__main__":
    key = jax.random.PRNGKey(0)
    k_x, k_w1, k_b1, k_w2, k_b2, k_t = jax.random.split(key, 6)

    # deterministic synthetic parameters (shapes implied by the synthetic model head)
    w1 = 0.1 * jax.random.normal(k_w1, (KH, KW, CIN, HIDDEN), jnp.float32)
    b1 = 0.1 * jax.random.normal(k_b1, (1, HIDDEN), jnp.float32)
    w2 = 0.1 * jax.random.normal(k_w2, (HIDDEN, NCLS), jnp.float32)
    b2 = 0.1 * jax.random.normal(k_b2, (1, NCLS), jnp.float32)

    # batch mimics base_trainer usage: batch[0]['input'] (NCHW) and the 'hm' target
    x_nchw = jax.random.normal(k_x, (B, CIN, H, W), jnp.float32)
    hm_target_nchw = jax.random.uniform(k_t, (B, NCLS, H, W), jnp.float32)
    batch = [{'input': x_nchw, 'hm': hm_target_nchw}]

    module = ModleWithLoss((w1, b1, w2, b2))
    out_last, loss, loss_stats = module.forward(batch)
    jax.block_until_ready((out_last['hm'], loss))

    # sanity check against a pure-JAX reference (tolerance accommodates bf16 operand quantization)
    ref_hm, ref_loss = _reference(x_nchw, w1, b1, w2, b2, hm_target_nchw)
    assert out_last['hm'].shape == (B, NCLS, H, W)
    assert jnp.allclose(out_last['hm'], ref_hm, atol=2e-2, rtol=2e-2)
    assert jnp.allclose(loss, ref_loss, atol=3e-3, rtol=3e-2)

    print("KERNEL_OK")
</pallas_src>

<mosaic_0001>
module attributes {stable_mosaic.version = 11 : i64} {
  func.func @_model_loss_kernel(%arg0: memref<48x512xbf16, #tpu.memory_space<vmem>>, %arg1: memref<40x48xbf16, #tpu.memory_space<vmem>>, %arg2: memref<4x40xbf16, #tpu.memory_space<vmem>>, %arg3: memref<4x512xf32, #tpu.memory_space<vmem>>, %arg4: memref<4x512xf32, #tpu.memory_space<vmem>>, %arg5: memref<1x1xf32, #tpu.memory_space<smem>>) attributes {dimension_semantics = [], scalar_prefetch = 0 : i64, scratch_operands = 0 : i64, tpu.core_type = #tpu.core_type<tc>} {
    %c0 = arith.constant 0 : index
    %c0_0 = arith.constant 0 : index
    %0 = vector.load %arg0[%c0, %c0_0] : memref<48x512xbf16, #tpu.memory_space<vmem>>, vector<48x512xbf16>
    %1 = arith.extf %0 : vector<48x512xbf16> to vector<48x512xf32>
    %c0_1 = arith.constant 0 : index
    %c0_2 = arith.constant 0 : index
    %2 = vector.load %arg1[%c0_1, %c0_2] : memref<40x48xbf16, #tpu.memory_space<vmem>>, vector<40x48xbf16>
    %3 = arith.extf %2 : vector<40x48xbf16> to vector<40x48xf32>
    %c0_3 = arith.constant 0 : index
    %c0_4 = arith.constant 0 : index
    %4 = vector.load %arg2[%c0_3, %c0_4] : memref<4x40xbf16, #tpu.memory_space<vmem>>, vector<4x40xbf16>
    %5 = arith.extf %4 : vector<4x40xbf16> to vector<4x40xf32>
    %cst = arith.constant dense<0.000000e+00> : vector<40x512xf32>
    %6 = tpu.matmul %3, %1, %cst {dimension_numbers = #tpu.dot_dimension_numbers<[1], [0], [0], [1], [0, 0, 1, 1], [], []>} : vector<40x48xf32>, vector<48x512xf32>, vector<40x512xf32> -> vector<40x512xf32>
    %cst_5 = arith.constant 0.000000e+00 : f32
    %7 = vector.broadcast %cst_5 : f32 to vector<40x512xf32>
    %8 = arith.maximumf %6, %7 : vector<40x512xf32>
    %cst_6 = arith.constant dense<0.000000e+00> : vector<4x512xf32>
    %9 = tpu.matmul %5, %8, %cst_6 {dimension_numbers = #tpu.dot_dimension_numbers<[1], [0], [0], [1], [0, 0, 1, 1], [], []>} : vector<4x40xf32>, vector<40x512xf32>, vector<4x512xf32> -> vector<4x512xf32>
    %10 = arith.negf %9 : vector<4x512xf32>
    %11 = math.exp %10 : vector<4x512xf32>
    %cst_7 = arith.constant 1.000000e+00 : f32
    %12 = vector.broadcast %cst_7 : f32 to vector<4x512xf32>
    %13 = arith.addf %12, %11 : vector<4x512xf32>
    %14 = arith.divf %12, %13 : vector<4x512xf32>
    %c0_8 = arith.constant 0 : index
    %c0_9 = arith.constant 0 : index
    %15 = vector.load %arg4[%c0_8, %c0_9] : memref<4x512xf32, #tpu.memory_space<vmem>>, vector<4x512xf32>
    tpu.vector_store %arg4[%c0_8, %c0_9], %14 {strides = array<i32>} : memref<4x512xf32, #tpu.memory_space<vmem>>, vector<4x512xf32>,
    %c0_10 = arith.constant 0 : index
    %c0_11 = arith.constant 0 : index
    %16 = vector.load %arg3[%c0_10, %c0_11] : memref<4x512xf32, #tpu.memory_space<vmem>>, vector<4x512xf32>
    %17 = arith.subf %14, %16 : vector<4x512xf32>
    %18 = arith.mulf %17, %17 : vector<4x512xf32>
    %19 = vector.shape_cast %18 : vector<4x512xf32> to vector<1x4x512xf32>
    %cst_12 = arith.constant dense<0.000000e+00> : vector<1xf32>
    %20 = vector.multi_reduction <add>, %19, %cst_12 [1, 2] : vector<1x4x512xf32> to vector<1xf32>
    %21 = vector.shape_cast %20 : vector<1xf32> to vector<1x1x1xf32>
    %22 = vector.extract %21[0, 0, 0] : f32 from vector<1x1x1xf32>
    %cst_13 = arith.constant 4.8828125E-4 : f32
    %23 = arith.mulf %22, %cst_13 : f32
    %c0_14 = arith.constant 0 : index
    %c0_15 = arith.constant 0 : index
    %24 = memref.load %arg5[%c0_14, %c0_15] : memref<1x1xf32, #tpu.memory_space<smem>>
    memref.store %23, %arg5[%c0_14, %c0_15] : memref<1x1xf32, #tpu.memory_space<smem>>
    return
  }
}

</mosaic_0001>

<llo_original>
// kernel: _forward_impl.1
$region0: #{_forward_impl.1}
  #allocation0 [shape = 'u32[]', space=smem, size = 0x4, offset = 0x4, fixed_abs, tag = 'smem constant byte address 0x4 - core index']
  #allocation1 [shape = 'u32[72,128]{1,0:T(1,128)}', space=vmem, size = 0x9000, scoped, tag = 'internal scratch']
  %s0 = inlined_call_operand.vmem [shape: bf16[48,512], index: 0, kind: input, shape index: {}]
  %s1 = inlined_call_operand.vmem [shape: bf16[40,48], index: 1, kind: input, shape index: {}]
  %s2 = inlined_call_operand.vmem [shape: bf16[4,40], index: 2, kind: input, shape index: {}]
  %s3 = inlined_call_operand.vmem [shape: f32[4,512], index: 3, kind: input, shape index: {}]
  %s4 = inlined_call_operand.vmem [shape: f32[4,512], index: 4, kind: output, shape index: {0}]
  %s5 = inlined_call_operand.hbm [shape: f32[1,1], index: 5, kind: output, shape index: {1}]
  %6 = xla_tuple %s4, %s5
  %s7 = sld [smem:[#allocation0]]
  $region34: #{_forward_impl.1} parent=0
    _
  %s9 = ssub.s32 1, %s7
  %s10 = scalar_select 0, %s9, %s7
  $region1: #{_forward_impl.1} parent=0
    #allocation2 [shape = 'u8[512]{0}', space=smem, size = 0x200, scoped, tag = 'output window, operand 1, single buffered']
    #allocation3 [shape = 's32[1]{0}', space=sflag, size = 0x4, scoped, tag = 'scoped memory for _forward_impl.1']
    %11 = vsyncpa [#allocation3], 0
    // Predicated region
    $region2: #{_forward_impl.1} parent=1 // pred_check
      _
    $region3: #{_forward_impl.1} parent=1 // pred_check_branch
      %13 = sbr.rel (0) target = $region5
    $region4: #{_forward_impl.1} parent=1 // pred_region
      _
    $region5: #{_forward_impl.1} parent=1 // pred_fallthru
      _
    // Predicated region
    $region6: #{_forward_impl.1} parent=1 // pred_check
      _
    $region7: #{_forward_impl.1} parent=1 // pred_check_branch
      %15 = sbr.rel (0) target = $region9
    $region8: #{_forward_impl.1} parent=1 // pred_region
      _
    $region9: #{_forward_impl.1} parent=1 // pred_fallthru
      _
    // Predicated region
    $region10: #{_forward_impl.1} parent=1 // pred_check
      _
    $region11: #{_forward_impl.1} parent=1 // pred_check_branch
      %17 = sbr.rel (0) target = $region13
    $region12: #{_forward_impl.1} parent=1 // pred_region
      _
    $region13: #{_forward_impl.1} parent=1 // pred_fallthru
      _
    // Predicated region
    $region14: #{_forward_impl.1} parent=1 // pred_check
      _
    $region15: #{_forward_impl.1} parent=1 // pred_check_branch
      %19 = sbr.rel (0) target = $region17
    $region16: #{_forward_impl.1} parent=1 // pred_region
      _
    $region17: #{_forward_impl.1} parent=1 // pred_fallthru
      _
    %v20 = vld [vmem:[%s0] sm:$0xff]
    %v21 = vld [vmem:[%s0 + $0x8] sm:$0xff]
    %v22 = vld [vmem:[%s0 + $0x10] sm:$0xff]
    %v23 = vld [vmem:[%s0 + $0x18] sm:$0xff]
    %v24 = vld [vmem:[%s0 + $0x20] sm:$0xff]
    %v25 = vld [vmem:[%s0 + $0x28] sm:$0xff]
    %v26 = vld [vmem:[%s0 + $0x30] sm:$0xff]
    %v27 = vld [vmem:[%s0 + $0x38] sm:$0xff]
    %v28 = vld [vmem:[%s0 + $0x40] sm:$0xff]
    %v29 = vld [vmem:[%s0 + $0x48] sm:$0xff]
    %v30 = vld [vmem:[%s0 + $0x50] sm:$0xff]
    %v31 = vld [vmem:[%s0 + $0x58] sm:$0xff]
    %v32 = vunpack.c.l.bf16 %v20
    %v33 = vunpack.c.h.bf16 %v20
    %v34 = vunpack.c.l.bf16 %v21
    %v35 = vunpack.c.h.bf16 %v21
    %v36 = vunpack.c.l.bf16 %v22
    %v37 = vunpack.c.h.bf16 %v22
    %v38 = vunpack.c.l.bf16 %v23
    %v39 = vunpack.c.h.bf16 %v23
    %v40 = vunpack.c.l.bf16 %v24
    %v41 = vunpack.c.h.bf16 %v24
    %v42 = vunpack.c.l.bf16 %v25
    %v43 = vunpack.c.h.bf16 %v25
    %v44 = vunpack.c.l.bf16 %v26
    %v45 = vunpack.c.h.bf16 %v26
    %v46 = vunpack.c.l.bf16 %v27
    %v47 = vunpack.c.h.bf16 %v27
    %v48 = vunpack.c.l.bf16 %v28
    %v49 = vunpack.c.h.bf16 %v28
    %v50 = vunpack.c.l.bf16 %v29
    %v51 = vunpack.c.h.bf16 %v29
    %v52 = vunpack.c.l.bf16 %v30
    %v53 = vunpack.c.h.bf16 %v30
    %v54 = vunpack.c.l.bf16 %v31
    %v55 = vunpack.c.h.bf16 %v31
    %v56 = vld [vmem:[%s1] sm:$0xf]
    %v57 = vld [vmem:[%s1 + $0x4] sm:$0xf]
    %v58 = vld [vmem:[%s1 + $0x8] sm:$0xf]
    %v59 = vld [vmem:[%s1 + $0xc] sm:$0xf]
    %v60 = vld [vmem:[%s1 + $0x10] sm:$0xf]
    %v61 = vunpack.c.l.bf16 %v56
    %v62 = vunpack.c.l.bf16 %v57
    %v63 = vunpack.c.l.bf16 %v58
    %v64 = vunpack.c.l.bf16 %v59
    %v65 = vunpack.c.l.bf16 %v60
    %v66 = vld [vmem:[%s2] sm:$0x3]
    %v67 = vunpack.c.l.bf16 %v66
    %vm68 = vcmask 392192
    %v70 = vsel %vm68, %v61, 0
    %v73 = vsel %vm68, %v62, 0
    %v76 = vsel %vm68, %v63, 0
    %v79 = vsel %vm68, %v64, 0
    %v82 = vsel %vm68, %v65, 0
    %84 = vmatpush.msra.mxu0 0.0
    %85 = vmatpush.msra.mxu0 0.0
    %86 = vmatpush.msra.mxu0 0.0
    %87 = vmatpush.msra.mxu0 0.0
    %88 = vmatpush.msra.mxu0 0.0
    %89 = vmatpush.msra.mxu0 0.0
    %90 = vmatpush.msra.mxu0 0.0
    %91 = vmatpush.msra.mxu0 0.0
    %92 = vmatpush.msra.mxu0 0.0
    %93 = vmatpush.msra.mxu0 0.0
    %94 = vmatpush.msra.mxu0 %v52
    %95 = vmatpush.msra.mxu0 %v48
    %96 = vmatpush.msra.mxu0 %v44
    %97 = vmatpush.msra.mxu0 %v40
    %98 = vmatpush.msra.mxu0 %v36
    %99 = vmatpush.msra.mxu0 %v32
    %100 = vmatmul.f32.gmra.mxu0 %v70
    %v101 = vpop.f32.mrf.mxu0
    %v102 = vadd.f32 0.0, %v101
    %103 = vmatmul.f32.gmra.mxu0 %v73
    %v104 = vpop.f32.mrf.mxu0
    %v105 = vadd.f32 0.0, %v104
    %106 = vmatmul.f32.gmra.mxu0 %v76
    %v107 = vpop.f32.mrf.mxu0
    %v108 = vadd.f32 0.0, %v107
    %109 = vmatmul.f32.gmra.mxu0 %v79
    %v110 = vpop.f32.mrf.mxu0
    %v111 = vadd.f32 0.0, %v110
    %112 = vmatmul.f32.gmra.mxu0 %v82
    %v113 = vpop.f32.mrf.mxu0
    %v114 = vadd.f32 0.0, %v113
    %115 = vdwg.mxu0
    %116 = vmatpush.msra.mxu0 0.0
    %117 = vmatpush.msra.mxu0 0.0
    %118 = vmatpush.msra.mxu0 0.0
    %119 = vmatpush.msra.mxu0 0.0
    %120 = vmatpush.msra.mxu0 0.0
    %121 = vmatpush.msra.mxu0 0.0
    %122 = vmatpush.msra.mxu0 0.0
    %123 = vmatpush.msra.mxu0 0.0
    %124 = vmatpush.msra.mxu0 0.0
    %125 = vmatpush.msra.mxu0 0.0
    %126 = vmatpush.msra.mxu0 %v53
    %127 = vmatpush.msra.mxu0 %v49
    %128 = vmatpush.msra.mxu0 %v45
    %129 = vmatpush.msra.mxu0 %v41
    %130 = vmatpush.msra.mxu0 %v37
    %131 = vmatpush.msra.mxu0 %v33
    %132 = vmatmul.f32.gmra.mxu0 %v70
    %v133 = vpop.f32.mrf.mxu0
    %v134 = vadd.f32 0.0, %v133
    %135 = vmatmul.f32.gmra.mxu0 %v73
    %v136 = vpop.f32.mrf.mxu0
    %v137 = vadd.f32 0.0, %v136
    %138 = vmatmul.f32.gmra.mxu0 %v76
    %v139 = vpop.f32.mrf.mxu0
    %v140 = vadd.f32 0.0, %v139
    %141 = vmatmul.f32.gmra.mxu0 %v79
    %v142 = vpop.f32.mrf.mxu0
    %v143 = vadd.f32 0.0, %v142
    %144 = vmatmul.f32.gmra.mxu0 %v82
    %v145 = vpop.f32.mrf.mxu0
    %v146 = vadd.f32 0.0, %v145
    %147 = vdwg.mxu0
    %148 = vmatpush.msra.mxu0 0.0
    %149 = vmatpush.msra.mxu0 0.0
    %150 = vmatpush.msra.mxu0 0.0
    %151 = vmatpush.msra.mxu0 0.0
    %152 = vmatpush.msra.mxu0 0.0
    %153 = vmatpush.msra.mxu0 0.0
    %154 = vmatpush.msra.mxu0 0.0
    %155 = vmatpush.msra.mxu0 0.0
    %156 = vmatpush.msra.mxu0 0.0
    %157 = vmatpush.msra.mxu0 0.0
    %158 = vmatpush.msra.mxu0 %v54
    %159 = vmatpush.msra.mxu0 %v50
    %160 = vmatpush.msra.mxu0 %v46
    %161 = vmatpush.msra.mxu0 %v42
    %162 = vmatpush.msra.mxu0 %v38
    %163 = vmatpush.msra.mxu0 %v34
    %164 = vmatmul.f32.gmra.mxu0 %v70
    %v165 = vpop.f32.mrf.mxu0
    %v166 = vadd.f32 0.0, %v165
    %167 = vmatmul.f32.gmra.mxu0 %v73
    %v168 = vpop.f32.mrf.mxu0
    %v169 = vadd.f32 0.0, %v168
    %170 = vmatmul.f32.gmra.mxu0 %v76
    %v171 = vpop.f32.mrf.mxu0
    %v172 = vadd.f32 0.0, %v171
    %173 = vmatmul.f32.gmra.mxu0 %v79
    %v174 = vpop.f32.mrf.mxu0
    %v175 = vadd.f32 0.0, %v174
    %176 = vmatmul.f32.gmra.mxu0 %v82
    %v177 = vpop.f32.mrf.mxu0
    %v178 = vadd.f32 0.0, %v177
    %179 = vdwg.mxu0
    %180 = vmatpush.msra.mxu0 0.0
    %181 = vmatpush.msra.mxu0 0.0
    %182 = vmatpush.msra.mxu0 0.0
    %183 = vmatpush.msra.mxu0 0.0
    %184 = vmatpush.msra.mxu0 0.0
    %185 = vmatpush.msra.mxu0 0.0
    %186 = vmatpush.msra.mxu0 0.0
    %187 = vmatpush.msra.mxu0 0.0
    %188 = vmatpush.msra.mxu0 0.0
    %189 = vmatpush.msra.mxu0 0.0
    %190 = vmatpush.msra.mxu0 %v55
    %191 = vmatpush.msra.mxu0 %v51
    %192 = vmatpush.msra.mxu0 %v47
    %193 = vmatpush.msra.mxu0 %v43
    %194 = vmatpush.msra.mxu0 %v39
    %195 = vmatpush.msra.mxu0 %v35
    %196 = vmatmul.f32.gmra.mxu0 %v70
    %v197 = vpop.f32.mrf.mxu0
    %v198 = vadd.f32 0.0, %v197
    %199 = vmatmul.f32.gmra.mxu0 %v73
    %v200 = vpop.f32.mrf.mxu0
    %v201 = vadd.f32 0.0, %v200
    %202 = vmatmul.f32.gmra.mxu0 %v76
    %v203 = vpop.f32.mrf.mxu0
    %v204 = vadd.f32 0.0, %v203
    %205 = vmatmul.f32.gmra.mxu0 %v79
    %v206 = vpop.f32.mrf.mxu0
    %v207 = vadd.f32 0.0, %v206
    %208 = vmatmul.f32.gmra.mxu0 %v82
    %v209 = vpop.f32.mrf.mxu0
    %v210 = vadd.f32 0.0, %v209
    %211 = vdwg.mxu0
    %v212 = vmax.f32 %v102, 0.0
    %v213 = vmax.f32 %v134, 0.0
    %v214 = vmax.f32 %v166, 0.0
    %v215 = vmax.f32 %v198, 0.0
    %v216 = vmax.f32 %v105, 0.0
    %v217 = vmax.f32 %v137, 0.0
    %v218 = vmax.f32 %v169, 0.0
    %v219 = vmax.f32 %v201, 0.0
    %v220 = vmax.f32 %v108, 0.0
    %v221 = vmax.f32 %v140, 0.0
    %v222 = vmax.f32 %v172, 0.0
    %v223 = vmax.f32 %v204, 0.0
    %v224 = vmax.f32 %v111, 0.0
    %v225 = vmax.f32 %v143, 0.0
    %v226 = vmax.f32 %v175, 0.0
    %v227 = vmax.f32 %v207, 0.0
    %v228 = vmax.f32 %v114, 0.0
    %v229 = vmax.f32 %v146, 0.0
    %v230 = vmax.f32 %v178, 0.0
    %v231 = vmax.f32 %v210, 0.0
    %vm232 = vcmask 326656
    %v234 = vsel %vm232, %v67, 0
    %236 = vmatpush.msra.mxu0 0.0
    %237 = vmatpush.msra.mxu0 0.0
    %238 = vmatpush.msra.mxu0 0.0
    %239 = vmatpush.msra.mxu0 0.0
    %240 = vmatpush.msra.mxu0 0.0
    %241 = vmatpush.msra.mxu0 0.0
    %242 = vmatpush.msra.mxu0 0.0
    %243 = vmatpush.msra.mxu0 0.0
    %244 = vmatpush.msra.mxu0 0.0
    %245 = vmatpush.msra.mxu0 0.0
    %246 = vmatpush.msra.mxu0 0.0
    %247 = vmatpush.msra.mxu0 %v228
    %248 = vmatpush.msra.mxu0 %v224
    %249 = vmatpush.msra.mxu0 %v220
    %250 = vmatpush.msra.mxu0 %v216
    %251 = vmatpush.msra.mxu0 %v212
    %252 = vmatmul.f32.gmra.mxu0 %v234
    %v253 = vpop.f32.mrf.mxu0
    %v254 = vadd.f32 0.0, %v253
    %255 = vdwg.mxu0
    %256 = vmatpush.msra.mxu0 0.0
    %257 = vmatpush.msra.mxu0 0.0
    %258 = vmatpush.msra.mxu0 0.0
    %259 = vmatpush.msra.mxu0 0.0
    %260 = vmatpush.msra.mxu0 0.0
    %261 = vmatpush.msra.mxu0 0.0
    %262 = vmatpush.msra.mxu0 0.0
    %263 = vmatpush.msra.mxu0 0.0
    %264 = vmatpush.msra.mxu0 0.0
    %265 = vmatpush.msra.mxu0 0.0
    %266 = vmatpush.msra.mxu0 0.0
    %267 = vmatpush.msra.mxu0 %v229
    %268 = vmatpush.msra.mxu0 %v225
    %269 = vmatpush.msra.mxu0 %v221
    %270 = vmatpush.msra.mxu0 %v217
    %271 = vmatpush.msra.mxu0 %v213
    %272 = vmatmul.f32.gmra.mxu0 %v234
    %v273 = vpop.f32.mrf.mxu0
    %v274 = vadd.f32 0.0, %v273
    %275 = vdwg.mxu0
    %276 = vmatpush.msra.mxu0 0.0
    %277 = vmatpush.msra.mxu0 0.0
    %278 = vmatpush.msra.mxu0 0.0
    %279 = vmatpush.msra.mxu0 0.0
    %280 = vmatpush.msra.mxu0 0.0
    %281 = vmatpush.msra.mxu0 0.0
    %282 = vmatpush.msra.mxu0 0.0
    %283 = vmatpush.msra.mxu0 0.0
    %284 = vmatpush.msra.mxu0 0.0
    %285 = vmatpush.msra.mxu0 0.0
    %286 = vmatpush.msra.mxu0 0.0
    %287 = vmatpush.msra.mxu0 %v230
    %288 = vmatpush.msra.mxu0 %v226
    %289 = vmatpush.msra.mxu0 %v222
    %290 = vmatpush.msra.mxu0 %v218
    %291 = vmatpush.msra.mxu0 %v214
    %292 = vmatmul.f32.gmra.mxu0 %v234
    %v293 = vpop.f32.mrf.mxu0
    %v294 = vadd.f32 0.0, %v293
    %295 = vdwg.mxu0
    %296 = vmatpush.msra.mxu0 0.0
    %297 = vmatpush.msra.mxu0 0.0
    %298 = vmatpush.msra.mxu0 0.0
    %299 = vmatpush.msra.mxu0 0.0
    %300 = vmatpush.msra.mxu0 0.0
    %301 = vmatpush.msra.mxu0 0.0
    %302 = vmatpush.msra.mxu0 0.0
    %303 = vmatpush.msra.mxu0 0.0
    %304 = vmatpush.msra.mxu0 0.0
    %305 = vmatpush.msra.mxu0 0.0
    %306 = vmatpush.msra.mxu0 0.0
    %307 = vmatpush.msra.mxu0 %v231
    %308 = vmatpush.msra.mxu0 %v227
    %309 = vmatpush.msra.mxu0 %v223
    %310 = vmatpush.msra.mxu0 %v219
    %311 = vmatpush.msra.mxu0 %v215
    %312 = vmatmul.f32.gmra.mxu0 %v234
    %v313 = vpop.f32.mrf.mxu0
    %v314 = vadd.f32 0.0, %v313
    %315 = vdwg.mxu0
    %v316 = vxor.u32 %v254, 2147483648
    %v317 = vxor.u32 %v274, 2147483648
    %v318 = vxor.u32 %v294, 2147483648
    %v319 = vxor.u32 %v314, 2147483648
    %v320 = vmul.f32 %v316, 1.442695
    %v321 = vpow.pop %v320
    %v322 = vmul.f32 %v317, 1.442695
    %v323 = vpow.pop %v322
    %v324 = vmul.f32 %v318, 1.442695
    %v325 = vpow.pop %v324
    %v326 = vmul.f32 %v319, 1.442695
    %v327 = vpow.pop %v326
    %v328 = vadd.f32 %v321, 1.0
    %v329 = vadd.f32 %v323, 1.0
    %v330 = vadd.f32 %v325, 1.0
    %v331 = vadd.f32 %v327, 1.0
    %v332 = vrcp.pop %v328
    %v333 = vmul.f32 %v328, %v332
    %v334 = vsub.f32 1.0, %v333
    %v335 = vmul.f32 %v332, %v334
    %v336 = vadd.f32 %v332, %v335
    %vm337 = vweird.f32 %v328
    %vm338 = vweird.f32 %v332
    %vm339 = vmor %vm337, %vm338
    %v340 = vsel %vm339, %v332, %v336
    %v341 = vand.u32 2147483647, %v328
    %vm342 = vcmp.eq.f32.partialorder %v341, 8.507059e+37
    %v343 = vand.u32 %v328, 2147483648
    %v344 = vor.u32 1.1754944e-38, %v343
    %v345 = vsel %vm342, %v344, %v340
    %v346 = vmul.f32 1.0, %v345
    %v347 = vrcp.pop %v329
    %v348 = vmul.f32 %v329, %v347
    %v349 = vsub.f32 1.0, %v348
    %v350 = vmul.f32 %v347, %v349
    %v351 = vadd.f32 %v347, %v350
    %vm352 = vweird.f32 %v329
    %vm353 = vweird.f32 %v347
    %vm354 = vmor %vm352, %vm353
    %v355 = vsel %vm354, %v347, %v351
    %v356 = vand.u32 2147483647, %v329
    %vm357 = vcmp.eq.f32.partialorder %v356, 8.507059e+37
    %v358 = vand.u32 %v329, 2147483648
    %v359 = vor.u32 1.1754944e-38, %v358
    %v360 = vsel %vm357, %v359, %v355
    %v361 = vmul.f32 1.0, %v360
    %v362 = vrcp.pop %v330
    %v363 = vmul.f32 %v330, %v362
    %v364 = vsub.f32 1.0, %v363
    %v365 = vmul.f32 %v362, %v364
    %v366 = vadd.f32 %v362, %v365
    %vm367 = vweird.f32 %v330
    %vm368 = vweird.f32 %v362
    %vm369 = vmor %vm367, %vm368
    %v370 = vsel %vm369, %v362, %v366
    %v371 = vand.u32 2147483647, %v330
    %vm372 = vcmp.eq.f32.partialorder %v371, 8.507059e+37
    %v373 = vand.u32 %v330, 2147483648
    %v374 = vor.u32 1.1754944e-38, %v373
    %v375 = vsel %vm372, %v374, %v370
    %v376 = vmul.f32 1.0, %v375
    %v377 = vrcp.pop %v331
    %v378 = vmul.f32 %v331, %v377
    %v379 = vsub.f32 1.0, %v378
    %v380 = vmul.f32 %v377, %v379
    %v381 = vadd.f32 %v377, %v380
    %vm382 = vweird.f32 %v331
    %vm383 = vweird.f32 %v377
    %vm384 = vmor %vm382, %vm383
    %v385 = vsel %vm384, %v377, %v381
    %v386 = vand.u32 2147483647, %v331
    %vm387 = vcmp.eq.f32.partialorder %v386, 8.507059e+37
    %v388 = vand.u32 %v331, 2147483648
    %v389 = vor.u32 1.1754944e-38, %v388
    %v390 = vsel %vm387, %v389, %v385
    %v391 = vmul.f32 1.0, %v390
    %v396 = vrot.slane %v361, 4
    %v397 = vrot.slane %v391, 4
    %vm398 = vcmask 1043456
    %v399 = vsel %vm398, %v346, %v396
    %v400 = vsel %vm398, %v376, %v397
    %403 = vst [vmem:[%s4] sm:$0xff] %v399
    %404 = vst [vmem:[%s4 + $0x8] sm:$0xff] %v400
    %v405 = vld [vmem:[%s3] sm:$0xff]
    %v406 = vld [vmem:[%s3 + $0x8] sm:$0xff]
    %409 = vst [vmem:[#allocation1] ss:$2 sm:$0xff] %v405
    %s410 = scalar_lea.vmem [#allocation1], 16
    %411 = vst [vmem:[%s410] ss:$2 sm:$0xff] %v406
    %v412 = vld.sshfl [vmem:[#allocation1] sm:$0xff pattern:$0x75316420]
    %v413 = vld.sshfl [vmem:[#allocation1 + $0x8] sm:$0xff pattern:$0x75316420]
    %v414 = vld.sshfl [vmem:[#allocation1 + $0x10] sm:$0xff pattern:$0x75316420]
    %v415 = vld.sshfl [vmem:[#allocation1 + $0x18] sm:$0xff pattern:$0x75316420]
    %v420 = vsub.f32 %v346, %v412
    %v421 = vsub.f32 %v361, %v413
    %v422 = vsub.f32 %v376, %v414
    %v423 = vsub.f32 %v391, %v415
    %v424 = vmul.f32 %v420, %v420
    %v425 = vmul.f32 %v421, %v421
    %v426 = vmul.f32 %v422, %v422
    %v427 = vmul.f32 %v423, %v423
    %v428 = vsel %vm398, %v424, 0.0
    %v429 = vsel %vm398, %v425, 0.0
    %v430 = vadd.f32 %v428, %v429
    %v431 = vsel %vm398, %v426, 0.0
    %v432 = vadd.f32 %v430, %v431
    %v433 = vsel %vm398, %v427, 0.0
    %v434 = vadd.f32 %v432, %v433
    %435 = vadd.xlane.f32.xlu0 %v434
    %v436 = vpop.xlane.xlu0 %435
    %v437 = vrot.slane %v436, 4
    %v438 = vadd.f32 %v436, %v437
    %v439 = vrot.slane %v438, 2
    %v440 = vadd.f32 %v438, %v439
    %v441 = vrot.slane %v440, 1
    %v442 = vadd.f32 %v440, %v441
    %s443 = vtos %v442
    %s444 = smul.f32 %s443, 0.00048828125
    %s445 = scalar_lea.smem [#allocation2], 0
    %446 = sst [smem:[%s445]] %s444
    // Predicated region
    $region18: #{_forward_impl.1} parent=1 // pred_check
      _
    $region19: #{_forward_impl.1} parent=1 // pred_check_branch
      %448 = sbr.rel (0) target = $region21
    $region20: #{_forward_impl.1} parent=1 // pred_region
      _
    $region21: #{_forward_impl.1} parent=1 // pred_fallthru
      _
    // Predicated region
    $region22: #{_forward_impl.1} parent=1 // pred_check
      _
    $region23: #{_forward_impl.1} parent=1 // pred_check_branch
      %450 = sbr.rel (0) target = $region25
    $region24: #{_forward_impl.1} parent=1 // pred_region
      %452 = vsyncadd [#allocation3], 0
      %s454 = sshll.u32 %s5, 4
      %s455 = int_to_ptr.hbm [resolvable:$true] %s454
      %457 = dma.smem_to_hbm [#allocation2], 16, %s455, [#allocation3]
    $region25: #{_forward_impl.1} parent=1 // pred_fallthru
      _
    // Predicated region
    $region26: #{_forward_impl.1} parent=1 // pred_check
      _
    $region27: #{_forward_impl.1} parent=1 // pred_check_branch
      %459 = sbr.rel (0) target = $region29
    $region28: #{_forward_impl.1} parent=1 // pred_region
      _
    $region29: #{_forward_impl.1} parent=1 // pred_fallthru
      _
    // Predicated region
    $region30: #{_forward_impl.1} parent=1 // pred_check
      _
    $region31: #{_forward_impl.1} parent=1 // pred_check_branch
      %461 = sbr.rel (0) target = $region33
    $region32: #{_forward_impl.1} parent=1 // pred_region
      %463 = dma.done [#allocation3], 16
    $region33: #{_forward_impl.1} parent=1 // pred_fallthru
      _
    %464 = sfence
    %465 = vsyncpa [#allocation3], 1

</llo_original>
